<compile_context>
chip_gen: v5e
topology: v5e:2x2
jax: 0.10.0
libtpu: 0.0.40
codegen_flags: <defaults>
</compile_context>

<pallas_src>
import jax
import jax.numpy as jnp
from jax.experimental import pallas as pl
from jax.experimental.pallas import tpu as pltpu


def _round_up(n, m):
    return ((n + m - 1) // m) * m


def _make_calo_kernel(head_sizes, weighted):
    """Builds the fused kernel.

    head_sizes: static per-head class counts (tuple of int).
    weighted:   per-head bool, whether class weights are applied.
    """

    def kernel(x_ref, tgt_ref, w_ref, out_ref):
        # x_ref:   [CT, TB] logits; all heads' classes concatenated on sublanes
        # tgt_ref: [NH, TB] int32 target index, already offset per head into
        #                   the concatenated class space
        # w_ref:   [CT, 1]  f32 class weights in the concatenated class space
        # out_ref: [NH, TB] f32 per-sample losses, one sublane row per head
        x = x_ref[...].astype(jnp.float32)
        tgt = tgt_ref[...]
        w = w_ref[...].astype(jnp.float32)
        ct, tb = x.shape
        cls = jax.lax.broadcasted_iota(jnp.int32, (ct, tb), 0)

        losses = []
        off = 0
        for h, c in enumerate(head_sizes):
            seg = (cls >= off) & (cls < off + c)               # this head's rows
            xm = jnp.where(seg, x, -jnp.inf)
            m = jnp.max(xm, axis=0, keepdims=True)             # [1, TB]
            p = jnp.exp(xm - m)                                # 0 outside segment
            lse = m + jnp.log(jnp.sum(p, axis=0, keepdims=True))
            onehot = cls == tgt[h:h + 1, :]                    # [CT, TB]
            x_t = jnp.sum(jnp.where(onehot, x, 0.0), axis=0, keepdims=True)
            nll = lse - x_t                                    # -log_softmax(x)[y]
            if weighted[h]:
                w_t = jnp.sum(jnp.where(onehot, w, 0.0), axis=0, keepdims=True)
                nll = w_t * nll
            losses.append(nll)
            off += c
        out_ref[...] = jnp.concatenate(losses, axis=0)

    return kernel


def _fused_ce(head_logits, head_targets, head_weights):
    """Fused per-sample weighted cross-entropy (reduction='none') for N heads.

    head_logits:  list of [B, C_h] arrays (native dtype).
    head_targets: list of [B] integer arrays.
    head_weights: list of [C_h] f32 arrays or None (unweighted head).
    Returns a list of [B] f32 per-sample losses, one per head.
    """
    nh = len(head_logits)
    batch = head_logits[0].shape[0]
    head_sizes = tuple(int(l.shape[1]) for l in head_logits)
    ct = sum(head_sizes)
    weighted = tuple(w is not None for w in head_weights)

    # Batch tile on lanes: multiple of 128, capped so per-block VMEM stays tiny
    # (safe for v7x's 64 MiB VMEM; double-buffered by the BlockSpec pipeline).
    tb = min(1024, _round_up(batch, 128))
    b_pad = _round_up(batch, tb)
    grid = (b_pad // tb,)

    # [CT, B_pad] logits in native dtype: classes on sublanes, batch on lanes.
    x_t = jnp.concatenate([l.T for l in head_logits], axis=0)
    # [NH, B_pad] int32 targets offset into the concatenated class space.
    offs = []
    off = 0
    for c in head_sizes:
        offs.append(off)
        off += c
    tgt_t = jnp.stack(
        [t.astype(jnp.int32) + o for t, o in zip(head_targets, offs)], axis=0)
    if b_pad > batch:
        x_t = jnp.pad(x_t, ((0, 0), (0, b_pad - batch)))
        tgt_t = jnp.pad(tgt_t, ((0, 0), (0, b_pad - batch)))

    # [CT, 1] combined class-weight column (unit weights for unweighted heads).
    w_col = jnp.concatenate([
        jnp.ones((c,), jnp.float32) if w is None else w.astype(jnp.float32)
        for c, w in zip(head_sizes, head_weights)
    ]).reshape(ct, 1)

    kernel = _make_calo_kernel(head_sizes, weighted)
    itemsize = jnp.dtype(x_t.dtype).itemsize
    cost = pl.CostEstimate(
        flops=6 * nh * b_pad * ct,
        transcendentals=nh * b_pad * (ct + 1),
        bytes_accessed=b_pad * ct * itemsize + 2 * nh * b_pad * 4 + ct * 4,
    )

    out = pl.pallas_call(
        kernel,
        out_shape=jax.ShapeDtypeStruct((nh, b_pad), jnp.float32),
        grid=grid,
        in_specs=[
            pl.BlockSpec((ct, tb), lambda i: (0, i)),   # logits tile
            pl.BlockSpec((nh, tb), lambda i: (0, i)),   # targets tile
            pl.BlockSpec((ct, 1), lambda i: (0, 0)),    # class weights (const)
        ],
        out_specs=pl.BlockSpec((nh, tb), lambda i: (0, i)),
        compiler_params=pltpu.CompilerParams(
            dimension_semantics=("parallel",)),
        cost_estimate=cost,
    )(x_t, tgt_t, w_col)

    return [out[h, :batch] for h in range(nh)]


def calo_loss(logits, targets, fine_emotion_weights, sentiment_weights):
    """CaloLoss.forward(logits, targets) with use_focal=False.

    logits  = (over_logits | None, (fine_emotion_logits, sentiment_logits))
    targets = [B, >=4] int32
    returns (over_loss | None, (fine_emotion_loss, sentiment_loss)), each [B] f32.
    """
    # TODO(synk): use_focal=True (FocalLoss) branch of the module is not implemented.
    over_logits, (fine_emotion_logits, sentiment_logits) = logits

    if over_logits is not None:
        over_loss, fine_loss, sent_loss = _fused_ce(
            [over_logits, fine_emotion_logits, sentiment_logits],
            [targets[:, 0], targets[:, 2], targets[:, 3]],
            [None, fine_emotion_weights, sentiment_weights])
    else:
        fine_loss, sent_loss = _fused_ce(
            [fine_emotion_logits, sentiment_logits],
            [targets[:, 2], targets[:, 3]],
            [fine_emotion_weights, sentiment_weights])
        over_loss = None

    return over_loss, (fine_loss, sent_loss)


def _reference(logits, targets, fine_w, sent_w):
    """Pure-JAX reference for correctness checking."""
    def ce(x, y, w):
        logp = jax.nn.log_softmax(x.astype(jnp.float32), axis=-1)
        picked = jnp.take_along_axis(logp, y[:, None], axis=-1)[:, 0]
        return -w[y] * picked

    over_logits, (fine_logits, sent_logits) = logits
    unit_w = jnp.ones((over_logits.shape[1],), jnp.float32)
    return (ce(over_logits, targets[:, 0], unit_w),
            (ce(fine_logits, targets[:, 2], fine_w),
             ce(sent_logits, targets[:, 3], sent_w)))


if __name__ == "__main__":
    key = jax.random.PRNGKey(0)
    B = 8
    C_OVER, C_FINE, C_SENT = 4, 7, 3  # over / fine-emotion / sentiment classes

    k1, k2, k3, k4, k5, k6 = jax.random.split(key, 6)
    over_logits = jax.random.normal(k1, (B, C_OVER), jnp.float32)
    fine_logits = jax.random.normal(k2, (B, C_FINE), jnp.float32)
    sent_logits = jax.random.normal(k3, (B, C_SENT), jnp.float32)

    # targets layout: column 0 = over label, column 2 = fine-emotion label,
    # column 3 = sentiment label (column 1 unused by this loss).
    targets = jnp.stack([
        jax.random.randint(k4, (B,), 0, C_OVER),
        jnp.zeros((B,), jnp.int32),
        jax.random.randint(k5, (B,), 0, C_FINE),
        jax.random.randint(k6, (B,), 0, C_SENT),
    ], axis=1).astype(jnp.int32)

    # Deterministic class weights (module's __init__ takes them as inputs).
    fine_emotion_weights = 0.5 + 0.1 * jnp.arange(C_FINE, dtype=jnp.float32)
    sentiment_weights = 1.0 + 0.25 * jnp.arange(C_SENT, dtype=jnp.float32)

    logits = (over_logits, (fine_logits, sent_logits))
    out = calo_loss(logits, targets, fine_emotion_weights, sentiment_weights)
    over_loss, (fine_loss, sent_loss) = jax.block_until_ready(out)

    ref_over, (ref_fine, ref_sent) = _reference(
        logits, targets, fine_emotion_weights, sentiment_weights)
    assert jnp.allclose(over_loss, ref_over, atol=1e-5, rtol=1e-5)
    assert jnp.allclose(fine_loss, ref_fine, atol=1e-5, rtol=1e-5)
    assert jnp.allclose(sent_loss, ref_sent, atol=1e-5, rtol=1e-5)

    print("KERNEL_OK")
</pallas_src>

<mosaic_0001>
module attributes {stable_mosaic.version = 11 : i64} {
  func.func @kernel(%arg0: i32, %arg1: memref<14x128xf32, #tpu.memory_space<vmem>>, %arg2: memref<3x128xi32, #tpu.memory_space<vmem>>, %arg3: memref<14x1xf32, #tpu.memory_space<vmem>>, %arg4: memref<3x128xf32, #tpu.memory_space<vmem>>) attributes {dimension_semantics = [#tpu.dimension_semantics<parallel>], iteration_bounds = array<i64: 1>, scalar_prefetch = 0 : i64, scratch_operands = 0 : i64, tpu.core_type = #tpu.core_type<tc>, window_params = [{transform_indices = @transform_0, window_bounds = array<i64: 14, 128>}, {transform_indices = @transform_1, window_bounds = array<i64: 3, 128>}, {pipeline_mode = #tpu.pipeline_mode<synchronous>, transform_indices = @transform_2, window_bounds = array<i64: 14, 1>}, {transform_indices = @transform_3, window_bounds = array<i64: 3, 128>}]} {
    %c0 = arith.constant 0 : index
    %c0_0 = arith.constant 0 : index
    %0 = vector.load %arg1[%c0, %c0_0] : memref<14x128xf32, #tpu.memory_space<vmem>>, vector<14x128xf32>
    %c0_1 = arith.constant 0 : index
    %c0_2 = arith.constant 0 : index
    %1 = vector.load %arg2[%c0_1, %c0_2] : memref<3x128xi32, #tpu.memory_space<vmem>>, vector<3x128xi32>
    %c0_3 = arith.constant 0 : index
    %c0_4 = arith.constant 0 : index
    %2 = vector.load %arg3[%c0_3, %c0_4] : memref<14x1xf32, #tpu.memory_space<vmem>>, vector<14x1xf32>
    %3 = tpu.iota {dimensions = array<i32: 0>} : vector<14x128xi32>
    %c0_i32 = arith.constant 0 : i32
    %4 = vector.broadcast %c0_i32 : i32 to vector<14x128xi32>
    %5 = arith.cmpi sge, %3, %4 : vector<14x128xi32>
    %c4_i32 = arith.constant 4 : i32
    %6 = vector.broadcast %c4_i32 : i32 to vector<14x128xi32>
    %7 = arith.cmpi slt, %3, %6 : vector<14x128xi32>
    %8 = arith.andi %5, %7 : vector<14x128xi1>
    %cst = arith.constant 0xFF800000 : f32
    %9 = vector.broadcast %cst : f32 to vector<14x128xf32>
    %10 = arith.select %8, %0, %9 : vector<14x128xi1>, vector<14x128xf32>
    %cst_5 = arith.constant dense<0xFF800000> : vector<128xf32>
    %11 = vector.multi_reduction <maximumf>, %10, %cst_5 [0] : vector<14x128xf32> to vector<128xf32>
    %12 = vector.shape_cast %11 : vector<128xf32> to vector<1x128xf32>
    %13 = vector.broadcast %12 : vector<1x128xf32> to vector<14x128xf32>
    %14 = arith.subf %10, %13 : vector<14x128xf32>
    %15 = math.exp %14 : vector<14x128xf32>
    %cst_6 = arith.constant dense<0.000000e+00> : vector<128xf32>
    %16 = vector.multi_reduction <add>, %15, %cst_6 [0] : vector<14x128xf32> to vector<128xf32>
    %17 = vector.shape_cast %16 : vector<128xf32> to vector<1x128xf32>
    %18 = math.log %17 : vector<1x128xf32>
    %19 = arith.addf %12, %18 : vector<1x128xf32>
    %20 = vector.extract_strided_slice %1 {offsets = [0, 0], sizes = [1, 128], strides = [1, 1]} : vector<3x128xi32> to vector<1x128xi32>
    %21 = vector.broadcast %20 : vector<1x128xi32> to vector<14x128xi32>
    %22 = arith.cmpi eq, %3, %21 : vector<14x128xi32>
    %cst_7 = arith.constant 0.000000e+00 : f32
    %23 = vector.broadcast %cst_7 : f32 to vector<14x128xf32>
    %24 = arith.select %22, %0, %23 : vector<14x128xi1>, vector<14x128xf32>
    %cst_8 = arith.constant dense<0.000000e+00> : vector<128xf32>
    %25 = vector.multi_reduction <add>, %24, %cst_8 [0] : vector<14x128xf32> to vector<128xf32>
    %26 = vector.shape_cast %25 : vector<128xf32> to vector<1x128xf32>
    %27 = arith.subf %19, %26 : vector<1x128xf32>
    %c4_i32_9 = arith.constant 4 : i32
    %28 = vector.broadcast %c4_i32_9 : i32 to vector<14x128xi32>
    %29 = arith.cmpi sge, %3, %28 : vector<14x128xi32>
    %c11_i32 = arith.constant 11 : i32
    %30 = vector.broadcast %c11_i32 : i32 to vector<14x128xi32>
    %31 = arith.cmpi slt, %3, %30 : vector<14x128xi32>
    %32 = arith.andi %29, %31 : vector<14x128xi1>
    %cst_10 = arith.constant 0xFF800000 : f32
    %33 = vector.broadcast %cst_10 : f32 to vector<14x128xf32>
    %34 = arith.select %32, %0, %33 : vector<14x128xi1>, vector<14x128xf32>
    %cst_11 = arith.constant dense<0xFF800000> : vector<128xf32>
    %35 = vector.multi_reduction <maximumf>, %34, %cst_11 [0] : vector<14x128xf32> to vector<128xf32>
    %36 = vector.shape_cast %35 : vector<128xf32> to vector<1x128xf32>
    %37 = vector.broadcast %36 : vector<1x128xf32> to vector<14x128xf32>
    %38 = arith.subf %34, %37 : vector<14x128xf32>
    %39 = math.exp %38 : vector<14x128xf32>
    %cst_12 = arith.constant dense<0.000000e+00> : vector<128xf32>
    %40 = vector.multi_reduction <add>, %39, %cst_12 [0] : vector<14x128xf32> to vector<128xf32>
    %41 = vector.shape_cast %40 : vector<128xf32> to vector<1x128xf32>
    %42 = math.log %41 : vector<1x128xf32>
    %43 = arith.addf %36, %42 : vector<1x128xf32>
    %44 = vector.extract_strided_slice %1 {offsets = [1, 0], sizes = [1, 128], strides = [1, 1]} : vector<3x128xi32> to vector<1x128xi32>
    %45 = vector.broadcast %44 : vector<1x128xi32> to vector<14x128xi32>
    %46 = arith.cmpi eq, %3, %45 : vector<14x128xi32>
    %cst_13 = arith.constant 0.000000e+00 : f32
    %47 = vector.broadcast %cst_13 : f32 to vector<14x128xf32>
    %48 = arith.select %46, %0, %47 : vector<14x128xi1>, vector<14x128xf32>
    %cst_14 = arith.constant dense<0.000000e+00> : vector<128xf32>
    %49 = vector.multi_reduction <add>, %48, %cst_14 [0] : vector<14x128xf32> to vector<128xf32>
    %50 = vector.shape_cast %49 : vector<128xf32> to vector<1x128xf32>
    %51 = arith.subf %43, %50 : vector<1x128xf32>
    %cst_15 = arith.constant 0.000000e+00 : f32
    %52 = vector.shape_cast %2 : vector<14x1xf32> to vector<14x1xf32>
    %53 = vector.broadcast %52 : vector<14x1xf32> to vector<14x128xf32>
    %54 = vector.broadcast %cst_15 : f32 to vector<14x128xf32>
    %55 = arith.select %46, %53, %54 : vector<14x128xi1>, vector<14x128xf32>
    %cst_16 = arith.constant dense<0.000000e+00> : vector<128xf32>
    %56 = vector.multi_reduction <add>, %55, %cst_16 [0] : vector<14x128xf32> to vector<128xf32>
    %57 = vector.shape_cast %56 : vector<128xf32> to vector<1x128xf32>
    %58 = arith.mulf %57, %51 : vector<1x128xf32>
    %c11_i32_17 = arith.constant 11 : i32
    %59 = vector.broadcast %c11_i32_17 : i32 to vector<14x128xi32>
    %60 = arith.cmpi sge, %3, %59 : vector<14x128xi32>
    %c14_i32 = arith.constant 14 : i32
    %61 = vector.broadcast %c14_i32 : i32 to vector<14x128xi32>
    %62 = arith.cmpi slt, %3, %61 : vector<14x128xi32>
    %63 = arith.andi %60, %62 : vector<14x128xi1>
    %cst_18 = arith.constant 0xFF800000 : f32
    %64 = vector.broadcast %cst_18 : f32 to vector<14x128xf32>
    %65 = arith.select %63, %0, %64 : vector<14x128xi1>, vector<14x128xf32>
    %cst_19 = arith.constant dense<0xFF800000> : vector<128xf32>
    %66 = vector.multi_reduction <maximumf>, %65, %cst_19 [0] : vector<14x128xf32> to vector<128xf32>
    %67 = vector.shape_cast %66 : vector<128xf32> to vector<1x128xf32>
    %68 = vector.broadcast %67 : vector<1x128xf32> to vector<14x128xf32>
    %69 = arith.subf %65, %68 : vector<14x128xf32>
    %70 = math.exp %69 : vector<14x128xf32>
    %cst_20 = arith.constant dense<0.000000e+00> : vector<128xf32>
    %71 = vector.multi_reduction <add>, %70, %cst_20 [0] : vector<14x128xf32> to vector<128xf32>
    %72 = vector.shape_cast %71 : vector<128xf32> to vector<1x128xf32>
    %73 = math.log %72 : vector<1x128xf32>
    %74 = arith.addf %67, %73 : vector<1x128xf32>
    %75 = vector.extract_strided_slice %1 {offsets = [2, 0], sizes = [1, 128], strides = [1, 1]} : vector<3x128xi32> to vector<1x128xi32>
    %76 = vector.broadcast %75 : vector<1x128xi32> to vector<14x128xi32>
    %77 = arith.cmpi eq, %3, %76 : vector<14x128xi32>
    %cst_21 = arith.constant 0.000000e+00 : f32
    %78 = vector.broadcast %cst_21 : f32 to vector<14x128xf32>
    %79 = arith.select %77, %0, %78 : vector<14x128xi1>, vector<14x128xf32>
    %cst_22 = arith.constant dense<0.000000e+00> : vector<128xf32>
    %80 = vector.multi_reduction <add>, %79, %cst_22 [0] : vector<14x128xf32> to vector<128xf32>
    %81 = vector.shape_cast %80 : vector<128xf32> to vector<1x128xf32>
    %82 = arith.subf %74, %81 : vector<1x128xf32>
    %cst_23 = arith.constant 0.000000e+00 : f32
    %83 = vector.shape_cast %2 : vector<14x1xf32> to vector<14x1xf32>
    %84 = vector.broadcast %83 : vector<14x1xf32> to vector<14x128xf32>
    %85 = vector.broadcast %cst_23 : f32 to vector<14x128xf32>
    %86 = arith.select %77, %84, %85 : vector<14x128xi1>, vector<14x128xf32>
    %cst_24 = arith.constant dense<0.000000e+00> : vector<128xf32>
    %87 = vector.multi_reduction <add>, %86, %cst_24 [0] : vector<14x128xf32> to vector<128xf32>
    %88 = vector.shape_cast %87 : vector<128xf32> to vector<1x128xf32>
    %89 = arith.mulf %88, %82 : vector<1x128xf32>
    %90 = tpu.concatenate %27, %58, %89 in 0 : vector<1x128xf32>, vector<1x128xf32>, vector<1x128xf32> -> vector<3x128xf32>
    %c0_25 = arith.constant 0 : index
    %c0_26 = arith.constant 0 : index
    %91 = vector.load %arg4[%c0_25, %c0_26] : memref<3x128xf32, #tpu.memory_space<vmem>>, vector<3x128xf32>
    tpu.vector_store %arg4[%c0_25, %c0_26], %90 {strides = array<i32>} : memref<3x128xf32, #tpu.memory_space<vmem>>, vector<3x128xf32>,
    return
  }
  func.func @transform_0(%arg0: i32) -> (i32, i32) {
    %c0_i32 = arith.constant 0 : i32
    %c0_i32_0 = arith.constant 0 : i32
    return %c0_i32, %arg0 : i32, i32
  }
  func.func @transform_1(%arg0: i32) -> (i32, i32) {
    %c0_i32 = arith.constant 0 : i32
    %c0_i32_0 = arith.constant 0 : i32
    return %c0_i32, %arg0 : i32, i32
  }
  func.func @transform_2(%arg0: i32) -> (i32, i32) {
    %c0_i32 = arith.constant 0 : i32
    %c0_i32_0 = arith.constant 0 : i32
    %c0_i32_1 = arith.constant 0 : i32
    return %c0_i32, %c0_i32_0 : i32, i32
  }
  func.func @transform_3(%arg0: i32) -> (i32, i32) {
    %c0_i32 = arith.constant 0 : i32
    %c0_i32_0 = arith.constant 0 : i32
    return %c0_i32, %arg0 : i32, i32
  }
}

</mosaic_0001>

<llo_original>
// kernel: tpu_custom_call.1
$region0: #{tpu_custom_call.1}
  #allocation0 [shape = 'u32[]', space=smem, size = 0x4, offset = 0x4, fixed_abs, tag = 'smem constant byte address 0x4 - core index']
  #allocation1 [shape = 'u32[72,128]{1,0:T(1,128)}', space=vmem, size = 0x9000, scoped, tag = 'internal scratch']
  %s0 = inlined_call_operand.vmem [shape: f32[14,128], index: 0, kind: input, shape index: {}]
  %s1 = inlined_call_operand.hbm [shape: s32[3,128], index: 1, kind: input, shape index: {}]
  %s2 = inlined_call_operand.vmem [shape: f32[14,1], index: 2, kind: input, shape index: {}]
  %s3 = inlined_call_operand.hbm [shape: f32[3,128], index: 3, kind: output, shape index: {}]
  %s4 = sld [smem:[#allocation0]]
  $region26: #{tpu_custom_call.1} parent=0
    _
  %s6 = ssub.s32 1, %s4
  %s7 = scalar_select 0, %s6, %s4
  $region1: #{tpu_custom_call.1} parent=0
    #allocation2 [shape = 'u8[2048]{0}', space=vmem, size = 0x800, scoped, tag = 'input window, operand 1, single buffered']
    #allocation3 [shape = 's32[1]{0}', space=sflag, size = 0x4, scoped, tag = 'scoped memory for tpu_custom_call.1']
    #allocation4 [shape = 's32[1]{0}', space=sflag, size = 0x4, scoped, tag = 'scoped memory for tpu_custom_call.1']
    #allocation5 [shape = 'u8[2048]{0}', space=vmem, size = 0x800, scoped, tag = 'output window, operand 0, single buffered']
    %8 = vsyncpa [#allocation3], 0
    %9 = vsyncpa [#allocation4], 0
    // Predicated region
    $region2: #{tpu_custom_call.1} parent=1 // pred_check
      _
    $region3: #{tpu_custom_call.1} parent=1 // pred_check_branch
      %11 = sbr.rel (0) target = $region5
    $region4: #{tpu_custom_call.1} parent=1 // pred_region
      _
    $region5: #{tpu_custom_call.1} parent=1 // pred_fallthru
      _
    // Predicated region
    $region6: #{tpu_custom_call.1} parent=1 // pred_check
      _
    $region7: #{tpu_custom_call.1} parent=1 // pred_check_branch
      %13 = sbr.rel (0) target = $region9
    $region8: #{tpu_custom_call.1} parent=1 // pred_region
      %15 = vsyncadd [#allocation3], 0
      %s17 = sshll.u32 %s1, 4
      %s18 = int_to_ptr.hbm [resolvable:$true] %s17
      %s19 = sshll.u32 [#allocation2], 4
      %s20 = int_to_ptr.vmem [resolvable:$true] %s19
      %22 = dma.hbm_to_vmem [thread:$0]  %s18, 64, %s20, [#allocation3]
    $region9: #{tpu_custom_call.1} parent=1 // pred_fallthru
      _
    // Predicated region
    $region10: #{tpu_custom_call.1} parent=1 // pred_check
      _
    $region11: #{tpu_custom_call.1} parent=1 // pred_check_branch
      %24 = sbr.rel (0) target = $region13
    $region12: #{tpu_custom_call.1} parent=1 // pred_region
      _
    $region13: #{tpu_custom_call.1} parent=1 // pred_fallthru
      _
    // Predicated region
    $region14: #{tpu_custom_call.1} parent=1 // pred_check
      _
    $region15: #{tpu_custom_call.1} parent=1 // pred_check_branch
      %26 = sbr.rel (0) target = $region17
    $region16: #{tpu_custom_call.1} parent=1 // pred_region
      %28 = dma.done [#allocation3], 64
    $region17: #{tpu_custom_call.1} parent=1 // pred_fallthru
      _
    %v29 = vld [vmem:[%s0] sm:$0xff]
    %v30 = vld [vmem:[%s0 + $0x8] sm:$0x3f]
    %v31 = vld [vmem:[#allocation2] sm:$0x7]
    %v32 = vld [vmem:[%s2] sm:$0xff]
    %v33 = vld [vmem:[%s2 + $0x8] sm:$0x3f]
    %v34 = vlaneseq
    %v35 = vshrl.u32 %v34, 7
    %v36 = vadd.s32 %v35, 8
    %vm37 = vcmp.ge.s32.totalorder %v35, 0
    %vm38 = vcmp.ge.s32.totalorder %v36, 0
    %vm39 = vcmp.lt.s32.totalorder %v35, 4
    %vm40 = vcmp.lt.s32.totalorder %v36, 4
    %vm41 = vmand %vm37, %vm39
    %vm42 = vmand %vm38, %vm40
    %v43 = vsel %vm41, %v29, -inf
    %v44 = vsel %vm42, %v30, -inf
    %vm45 = vcmask 1045504
    %v46 = vsel %vm45, %v44, -inf
    %v47 = vmax.f32 %v43, %v46
    %v48 = vrot.slane %v47, 4
    %v49 = vmax.f32 %v47, %v48
    %v50 = vrot.slane %v49, 2
    %v51 = vmax.f32 %v49, %v50
    %v52 = vrot.slane %v51, 1
    %v53 = vmax.f32 %v51, %v52
    %v54 = vsub.f32 %v43, %v53
    %v55 = vsub.f32 %v44, %v53
    %v56 = vmul.f32 %v54, 1.442695
    %v57 = vpow.pop %v56
    %v58 = vmul.f32 %v55, 1.442695
    %v59 = vpow.pop %v58
    %v60 = vsel %vm45, %v59, 0.0
    %v61 = vadd.f32 %v57, %v60
    %v62 = vrot.slane %v61, 4
    %v63 = vadd.f32 %v61, %v62
    %v64 = vrot.slane %v63, 2
    %v65 = vadd.f32 %v63, %v64
    %v66 = vrot.slane %v65, 1
    %v67 = vadd.f32 %v65, %v66
    %v68 = vlog2.pop %v67
    %v69 = vmul.f32 %v68, 0.6931472
    %v70 = vadd.f32 %v53, %v69
    %v71 = vperm.slane %v31, 0
    %vm72 = vcmp.eq.s32.totalorder %v35, %v71
    %vm73 = vcmp.eq.s32.totalorder %v36, %v71
    %v74 = vsel %vm72, %v29, 0.0
    %v75 = vsel %vm73, %v30, 0.0
    %v76 = vsel %vm45, %v75, 0.0
    %v77 = vadd.f32 %v74, %v76
    %v78 = vrot.slane %v77, 4
    %v79 = vadd.f32 %v77, %v78
    %v80 = vrot.slane %v79, 2
    %v81 = vadd.f32 %v79, %v80
    %v82 = vrot.slane %v81, 1
    %v83 = vadd.f32 %v81, %v82
    %v84 = vsub.f32 %v70, %v83
    %vm85 = vcmp.ge.s32.totalorder %v35, 4
    %vm86 = vcmp.ge.s32.totalorder %v36, 4
    %vm87 = vcmp.lt.s32.totalorder %v35, 11
    %vm88 = vcmp.lt.s32.totalorder %v36, 11
    %vm89 = vmand %vm85, %vm87
    %vm90 = vmand %vm86, %vm88
    %v91 = vsel %vm89, %v29, -inf
    %v92 = vsel %vm90, %v30, -inf
    %v93 = vsel %vm45, %v92, -inf
    %v94 = vmax.f32 %v91, %v93
    %v95 = vrot.slane %v94, 4
    %v96 = vmax.f32 %v94, %v95
    %v97 = vrot.slane %v96, 2
    %v98 = vmax.f32 %v96, %v97
    %v99 = vrot.slane %v98, 1
    %v100 = vmax.f32 %v98, %v99
    %v101 = vsub.f32 %v91, %v100
    %v102 = vsub.f32 %v92, %v100
    %v103 = vmul.f32 %v101, 1.442695
    %v104 = vpow.pop %v103
    %v105 = vmul.f32 %v102, 1.442695
    %v106 = vpow.pop %v105
    %v107 = vsel %vm45, %v106, 0.0
    %v108 = vadd.f32 %v104, %v107
    %v109 = vrot.slane %v108, 4
    %v110 = vadd.f32 %v108, %v109
    %v111 = vrot.slane %v110, 2
    %v112 = vadd.f32 %v110, %v111
    %v113 = vrot.slane %v112, 1
    %v114 = vadd.f32 %v112, %v113
    %v115 = vlog2.pop %v114
    %v116 = vmul.f32 %v115, 0.6931472
    %v117 = vadd.f32 %v100, %v116
    %v118 = vperm.slane %v31, 1
    %vm119 = vcmp.eq.s32.totalorder %v35, %v118
    %vm120 = vcmp.eq.s32.totalorder %v36, %v118
    %v121 = vsel %vm119, %v29, 0.0
    %v122 = vsel %vm120, %v30, 0.0
    %v123 = vsel %vm45, %v122, 0.0
    %v124 = vadd.f32 %v121, %v123
    %v125 = vrot.slane %v124, 4
    %v126 = vadd.f32 %v124, %v125
    %v127 = vrot.slane %v126, 2
    %v128 = vadd.f32 %v126, %v127
    %v129 = vrot.slane %v128, 1
    %v130 = vadd.f32 %v128, %v129
    %v131 = vsub.f32 %v117, %v130
    %133 = vset.pattern.permute.xlu0 0
    %134 = vperm.xlu0 %133, %v32
    %v135 = vpop.permute.xlu0 %134
    %138 = vset.pattern.permute.xlu0 0
    %139 = vperm.xlu0 %138, %v33
    %v140 = vpop.permute.xlu0 %139
    %v142 = vsel %vm119, %v135, 0.0
    %v143 = vsel %vm120, %v140, 0.0
    %v144 = vsel %vm45, %v143, 0.0
    %v145 = vadd.f32 %v142, %v144
    %v146 = vrot.slane %v145, 4
    %v147 = vadd.f32 %v145, %v146
    %v148 = vrot.slane %v147, 2
    %v149 = vadd.f32 %v147, %v148
    %v150 = vrot.slane %v149, 1
    %v151 = vadd.f32 %v149, %v150
    %v152 = vmul.f32 %v151, %v131
    %vm153 = vcmp.ge.s32.totalorder %v35, 11
    %vm154 = vcmp.ge.s32.totalorder %v36, 11
    %vm155 = vcmp.lt.s32.totalorder %v35, 14
    %vm156 = vcmp.lt.s32.totalorder %v36, 14
    %vm157 = vmand %vm153, %vm155
    %vm158 = vmand %vm154, %vm156
    %v159 = vsel %vm157, %v29, -inf
    %v160 = vsel %vm158, %v30, -inf
    %v161 = vsel %vm45, %v160, -inf
    %v162 = vmax.f32 %v159, %v161
    %v163 = vrot.slane %v162, 4
    %v164 = vmax.f32 %v162, %v163
    %v165 = vrot.slane %v164, 2
    %v166 = vmax.f32 %v164, %v165
    %v167 = vrot.slane %v166, 1
    %v168 = vmax.f32 %v166, %v167
    %v169 = vsub.f32 %v159, %v168
    %v170 = vsub.f32 %v160, %v168
    %v171 = vmul.f32 %v169, 1.442695
    %v172 = vpow.pop %v171
    %v173 = vmul.f32 %v170, 1.442695
    %v174 = vpow.pop %v173
    %v175 = vsel %vm45, %v174, 0.0
    %v176 = vadd.f32 %v172, %v175
    %v177 = vrot.slane %v176, 4
    %v178 = vadd.f32 %v176, %v177
    %v179 = vrot.slane %v178, 2
    %v180 = vadd.f32 %v178, %v179
    %v181 = vrot.slane %v180, 1
    %v182 = vadd.f32 %v180, %v181
    %v183 = vlog2.pop %v182
    %v184 = vmul.f32 %v183, 0.6931472
    %v185 = vadd.f32 %v168, %v184
    %v186 = vperm.slane %v31, 2
    %vm187 = vcmp.eq.s32.totalorder %v35, %v186
    %vm188 = vcmp.eq.s32.totalorder %v36, %v186
    %v189 = vsel %vm187, %v29, 0.0
    %v190 = vsel %vm188, %v30, 0.0
    %v191 = vsel %vm45, %v190, 0.0
    %v192 = vadd.f32 %v189, %v191
    %v193 = vrot.slane %v192, 4
    %v194 = vadd.f32 %v192, %v193
    %v195 = vrot.slane %v194, 2
    %v196 = vadd.f32 %v194, %v195
    %v197 = vrot.slane %v196, 1
    %v198 = vadd.f32 %v196, %v197
    %v199 = vsub.f32 %v185, %v198
    %v200 = vsel %vm187, %v135, 0.0
    %v201 = vsel %vm188, %v140, 0.0
    %v202 = vsel %vm45, %v201, 0.0
    %v203 = vadd.f32 %v200, %v202
    %v204 = vrot.slane %v203, 4
    %v205 = vadd.f32 %v203, %v204
    %v206 = vrot.slane %v205, 2
    %v207 = vadd.f32 %v205, %v206
    %v208 = vrot.slane %v207, 1
    %v209 = vadd.f32 %v207, %v208
    %v210 = vmul.f32 %v209, %v199
    %vm211 = vcmask 1040384
    %v212 = vsel %vm211, %v84, %v152
    %vm213 = vcmask 1041408
    %v214 = vsel %vm213, %v212, %v210
    %215 = vst [vmem:[#allocation5] sm:$0x7] %v214
    // Predicated region
    $region18: #{tpu_custom_call.1} parent=1 // pred_check
      _
    $region19: #{tpu_custom_call.1} parent=1 // pred_check_branch
      %217 = sbr.rel (0) target = $region21
    $region20: #{tpu_custom_call.1} parent=1 // pred_region
      %219 = vsyncadd [#allocation4], 0
      %s221 = sshll.u32 [#allocation5], 4
      %s222 = int_to_ptr.vmem [resolvable:$true] %s221
      %s223 = sshll.u32 %s3, 4
      %s224 = int_to_ptr.hbm [resolvable:$true] %s223
      %226 = dma.vmem_to_hbm [thread:$0]  %s222, 64, %s224, [#allocation4]
    $region21: #{tpu_custom_call.1} parent=1 // pred_fallthru
      _
    // Predicated region
    $region22: #{tpu_custom_call.1} parent=1 // pred_check
      _
    $region23: #{tpu_custom_call.1} parent=1 // pred_check_branch
      %228 = sbr.rel (0) target = $region25
    $region24: #{tpu_custom_call.1} parent=1 // pred_region
      %230 = dma.done [#allocation4], 64
    $region25: #{tpu_custom_call.1} parent=1 // pred_fallthru
      _
    %231 = vsyncpa [#allocation3], 1
    %232 = vsyncpa [#allocation4], 1

</llo_original>
